<compile_context>
chip_gen: v7x
topology: tpu7x:2x2x1
jax: 0.10.0
libtpu: 0.0.40
codegen_flags: <defaults>
</compile_context>

<pallas_src>
import jax
import jax.numpy as jnp
from jax import lax
from jax.experimental import pallas as pl
from jax.experimental.pallas import tpu as pltpu


def _fold_bn(gamma, beta, mean, var, eps):
    scale = gamma / jnp.sqrt(var + eps)
    shift = beta - mean * scale
    return scale.astype(jnp.float32), shift.astype(jnp.float32)


def _pair(v):
    return (int(v), int(v)) if isinstance(v, int) else (int(v[0]), int(v[1]))


def fish_bottleneck(x, params, *, stride=1, dilation=1, eps=1e-5, mxu_dtype=None):
    """x: (N, C_in, H, W) NCHW (PyTorch layout). Returns (N, C_out, H_out, W_out)."""
    N, C_in, H, W = x.shape
    sh, sw = _pair(stride)
    dh, dw = _pair(dilation)
    w1 = params["w1"]          # (mid, C_in, 1, 1)
    w2 = params["w2"]          # (mid, mid, 3, 3)
    w3 = params["w3"]          # (C_out, mid, 1, 1)
    mid = w1.shape[0]
    C_out = w3.shape[0]
    # kernel 3, padding == dilation  =>  out = floor((X - 1) / s) + 1
    H_out = (H - 1) // sh + 1
    W_out = (W - 1) // sw + 1
    P = H * W
    P_out = H_out * W_out
    strided = (sh != 1) or (sw != 1)

    pad_amt = dh * W + dw                    # largest |flat tap offset|
    PAD = -(-pad_amt // 128) * 128           # 128-lane-aligned zero margin
    wdt = jnp.float32 if mxu_dtype is None else mxu_dtype

    # ---- plain-JAX glue: fold BN, pre-shape weights (all tiny, resident) ----
    s1, b1 = _fold_bn(*params["bn1"], eps=eps)            # (C_in,)
    s2, b2 = _fold_bn(*params["bn2"], eps=eps)            # (mid,)
    s3, b3 = _fold_bn(*params["bn3"], eps=eps)            # (mid,)

    # BN2 scale folded into conv1 output channels, BN3 scale into conv2 output
    # channels (exact for bias-free convs); only the shifts b2/b3 stay.
    w1_m = (s2[:, None] * w1.reshape(mid, C_in).astype(jnp.float32)).astype(wdt)
    w2_f = s3[:, None, None, None] * w2.astype(jnp.float32)          # (o, i, ky, kx)
    w2_m = w2_f.transpose(0, 2, 3, 1).reshape(mid, 9 * mid).astype(wdt)  # (o, t*mid+i)
    w3_m = w3.reshape(C_out, mid).astype(jnp.float32).astype(wdt)

    # Horizontal validity masks per kx. Vertical out-of-range taps read the
    # zero margins of the padded flat buffer, so no vertical mask is needed.
    ww = jnp.arange(W)
    m_rows = []
    for kx in range(3):
        dx = (kx - 1) * dw
        m_rows.append(jnp.tile(((ww + dx >= 0) & (ww + dx < W)).astype(jnp.float32), H))
    masks = jnp.stack(m_rows)                                         # (3, P)

    x_flat = x.reshape(N, C_in, P)          # free: contiguous NCHW reshape

    def kernel(x_ref, s1_ref, b1_ref, w1_ref, b2_ref, w2_ref, mk_ref,
               b3_ref, w3_ref, *rest):
        if strided:
            sel_ref, o_ref, pad_ref = rest
        else:
            o_ref, pad_ref = rest

        # ---- stage 1: BN1 + ReLU + 1x1 conv (BN2 scale pre-folded) ----
        xv = x_ref[...].astype(jnp.float32)                            # (C_in, P)
        a1 = jnp.maximum(xv * s1_ref[...] + b1_ref[...], 0.0)
        y1 = jnp.dot(w1_ref[...], a1.astype(w1_ref.dtype),
                     preferred_element_type=jnp.float32)               # (mid, P)
        a2 = jnp.maximum(y1 + b2_ref[...], 0.0)

        # ---- stage 2: flat zero-margin buffer + im2col + one K=9*mid matmul ----
        # Zero only the margins (every step: cheap, megacore-safe); interior is
        # fully overwritten by the lane-aligned store of a2.
        pad_ref[:, :PAD] = jnp.zeros((mid, PAD), jnp.float32)
        pad_ref[:, PAD + P:] = jnp.zeros((mid, PAD), jnp.float32)
        pad_ref[:, PAD:PAD + P] = a2

        taps = []
        for ky in range(3):
            for kx in range(3):
                off = (ky - 1) * dh * W + (kx - 1) * dw
                tap = pad_ref[:, PAD + off:PAD + off + P]              # (mid, P)
                if kx != 1:                       # kill horizontal row-bleed
                    tap = tap * mk_ref[kx:kx + 1, :]
                taps.append(tap)
        col = jnp.concatenate(taps, axis=0)                            # (9*mid, P)
        y2 = jnp.dot(w2_ref[...], col.astype(w2_ref.dtype),
                     preferred_element_type=jnp.float32)               # (mid, P)

        if strided:   # decimate to the strided output grid with a 0/1 matmul
            y2 = jnp.dot(y2, sel_ref[...], preferred_element_type=jnp.float32)

        # ---- stage 3: (BN3 scale pre-folded) shift + ReLU + 1x1 conv ----
        a3 = jnp.maximum(y2 + b3_ref[...], 0.0)                        # (mid, P_out)
        out = jnp.dot(w3_ref[...], a3.astype(w3_ref.dtype),
                      preferred_element_type=jnp.float32)              # (C_out, P_out)
        o_ref[...] = out.astype(o_ref.dtype)

    const2 = lambda n: (0, 0)
    in_specs = [
        pl.BlockSpec((None, C_in, P), lambda n: (n, 0, 0)),   # x: one image / step
        pl.BlockSpec((C_in, 1), const2), pl.BlockSpec((C_in, 1), const2),
        pl.BlockSpec((mid, C_in), const2),
        pl.BlockSpec((mid, 1), const2),
        pl.BlockSpec((mid, 9 * mid), const2),
        pl.BlockSpec((3, P), const2),
        pl.BlockSpec((mid, 1), const2),
        pl.BlockSpec((C_out, mid), const2),
    ]
    args = [x_flat,
            s1.reshape(C_in, 1), b1.reshape(C_in, 1), w1_m,
            b2.reshape(mid, 1), w2_m, masks,
            b3.reshape(mid, 1), w3_m]
    if strided:
        src = ((jnp.arange(H_out) * sh)[:, None] * W
               + (jnp.arange(W_out) * sw)[None, :]).reshape(-1)         # (P_out,)
        sel = jnp.zeros((P, P_out), jnp.float32).at[src, jnp.arange(P_out)].set(1.0)
        in_specs.append(pl.BlockSpec((P, P_out), const2))
        args.append(sel)

    out_specs = pl.BlockSpec((None, C_out, P_out), lambda n: (n, 0, 0))

    itemsize = jnp.dtype(x.dtype).itemsize
    flops = int(N * (2 * mid * C_in * P + 2 * mid * 9 * mid * P
                     + (2 * mid * P * P_out if strided else 0)
                     + 2 * C_out * mid * P_out
                     + 3 * C_in * P + 2 * mid * P + 2 * mid * P_out))
    pbytes = int(jnp.dtype(wdt).itemsize * (w1_m.size + w2_m.size + w3_m.size)
                 + 4 * (masks.size + 2 * C_in + 2 * mid
                        + (P * P_out if strided else 0)))
    bytes_accessed = int(N * (C_in * P + C_out * P_out) * itemsize + pbytes)

    out_flat = pl.pallas_call(
        kernel,
        out_shape=jax.ShapeDtypeStruct((N, C_out, P_out), x.dtype),
        grid=(N,),
        in_specs=in_specs,
        out_specs=out_specs,
        scratch_shapes=[pltpu.VMEM((mid, 2 * PAD + P), jnp.float32)],
        compiler_params=pltpu.CompilerParams(dimension_semantics=("parallel",)),
        cost_estimate=pl.CostEstimate(flops=flops, transcendentals=0,
                                      bytes_accessed=bytes_accessed),
    )(*args)

    return out_flat.reshape(N, C_out, H_out, W_out)     # free contiguous reshape


def _reference(x, params, *, stride=1, dilation=1, eps=1e-5):
    """Pure-JAX (NCHW) reference of the same eval-mode forward pass."""
    def bn_relu(v, bn):
        gamma, beta, mean, var = bn
        sc = gamma / jnp.sqrt(var + eps)
        sh = beta - mean * sc
        return jnp.maximum(v * sc[None, :, None, None] + sh[None, :, None, None], 0.0)

    dn = ("NCHW", "OIHW", "NCHW")
    h = bn_relu(x, params["bn1"])
    h = lax.conv_general_dilated(h, params["w1"], (1, 1), "VALID",
                                 dimension_numbers=dn)
    h = bn_relu(h, params["bn2"])
    h = lax.conv_general_dilated(h, params["w2"], (stride, stride),
                                 ((dilation, dilation), (dilation, dilation)),
                                 rhs_dilation=(dilation, dilation),
                                 dimension_numbers=dn)
    h = bn_relu(h, params["bn3"])
    h = lax.conv_general_dilated(h, params["w3"], (1, 1), "VALID",
                                 dimension_numbers=dn)
    return h


if __name__ == "__main__":
    N, C_in, C_out = 2, 16, 32
    H = W = 16
    mid = C_out // 4          # 8

    key = jax.random.PRNGKey(0)
    ks = jax.random.split(key, 7)

    def bn_params(k, c):
        k1, k2, k3, k4 = jax.random.split(k, 4)
        return (jax.random.uniform(k1, (c,), jnp.float32, 0.5, 1.5),   # gamma
                jax.random.normal(k2, (c,), jnp.float32) * 0.1,        # beta
                jax.random.normal(k3, (c,), jnp.float32) * 0.1,        # running mean
                jax.random.uniform(k4, (c,), jnp.float32, 0.5, 1.5))   # running var

    x = jax.random.normal(ks[0], (N, C_in, H, W), jnp.float32)
    params = {
        "bn1": bn_params(ks[1], C_in),
        "w1": jax.random.normal(ks[2], (mid, C_in, 1, 1), jnp.float32) * 0.2,
        "bn2": bn_params(ks[3], mid),
        "w2": jax.random.normal(ks[4], (mid, mid, 3, 3), jnp.float32) * 0.2,
        "bn3": bn_params(ks[5], mid),
        "w3": jax.random.normal(ks[6], (C_out, mid, 1, 1), jnp.float32) * 0.2,
    }

    # f32 path: stride 1 (dil 1 and 2) and the strided (decimation-matmul) path.
    for (stride, dilation) in [(1, 1), (1, 2), (2, 1)]:
        out = fish_bottleneck(x, params, stride=stride, dilation=dilation)
        out = jax.block_until_ready(out)
        ref = _reference(x, params, stride=stride, dilation=dilation)
        assert out.shape == ref.shape, (out.shape, ref.shape)
        max_err = float(jnp.max(jnp.abs(out - ref)))
        assert jnp.allclose(out, ref, atol=2e-4, rtol=2e-4), max_err

    # bf16-MXU-operand path (v6e/v7x suggestion): just verify it compiles & runs.
    out_bf16 = fish_bottleneck(x, params, stride=1, dilation=1,
                               mxu_dtype=jnp.bfloat16)
    out_bf16 = jax.block_until_ready(out_bf16)
    assert out_bf16.shape == (N, C_out, H, W)
    assert bool(jnp.all(jnp.isfinite(out_bf16)))

    print("KERNEL_OK")
</pallas_src>

<mosaic_0001>
module attributes {stable_mosaic.version = 11 : i64} {
  func.func @kernel(%arg0: i32, %arg1: memref<1x16x256xf32, #tpu.memory_space<vmem>>, %arg2: memref<16x1xf32, #tpu.memory_space<vmem>>, %arg3: memref<16x1xf32, #tpu.memory_space<vmem>>, %arg4: memref<8x16xf32, #tpu.memory_space<vmem>>, %arg5: memref<8x1xf32, #tpu.memory_space<vmem>>, %arg6: memref<8x72xf32, #tpu.memory_space<vmem>>, %arg7: memref<3x256xf32, #tpu.memory_space<vmem>>, %arg8: memref<8x1xf32, #tpu.memory_space<vmem>>, %arg9: memref<32x8xf32, #tpu.memory_space<vmem>>, %arg10: memref<1x32x256xf32, #tpu.memory_space<vmem>>, %arg11: memref<8x512xf32, #tpu.memory_space<vmem>>) attributes {dimension_semantics = [#tpu.dimension_semantics<parallel>], iteration_bounds = array<i64: 2>, scalar_prefetch = 0 : i64, scratch_operands = 1 : i64, tpu.core_type = #tpu.core_type<tc>, window_params = [{transform_indices = @transform_0, window_bounds = array<i64: 1, 16, 256>}, {pipeline_mode = #tpu.pipeline_mode<synchronous>, transform_indices = @transform_1, window_bounds = array<i64: 16, 1>}, {pipeline_mode = #tpu.pipeline_mode<synchronous>, transform_indices = @transform_2, window_bounds = array<i64: 16, 1>}, {pipeline_mode = #tpu.pipeline_mode<synchronous>, transform_indices = @transform_3, window_bounds = array<i64: 8, 16>}, {pipeline_mode = #tpu.pipeline_mode<synchronous>, transform_indices = @transform_4, window_bounds = array<i64: 8, 1>}, {pipeline_mode = #tpu.pipeline_mode<synchronous>, transform_indices = @transform_5, window_bounds = array<i64: 8, 72>}, {pipeline_mode = #tpu.pipeline_mode<synchronous>, transform_indices = @transform_6, window_bounds = array<i64: 3, 256>}, {pipeline_mode = #tpu.pipeline_mode<synchronous>, transform_indices = @transform_7, window_bounds = array<i64: 8, 1>}, {pipeline_mode = #tpu.pipeline_mode<synchronous>, transform_indices = @transform_8, window_bounds = array<i64: 32, 8>}, {transform_indices = @transform_9, window_bounds = array<i64: 1, 32, 256>}]} {
    %c0 = arith.constant 0 : index
    %c0_0 = arith.constant 0 : index
    %c0_1 = arith.constant 0 : index
    %0 = vector.load %arg1[%c0, %c0_0, %c0_1] : memref<1x16x256xf32, #tpu.memory_space<vmem>>, vector<1x16x256xf32>
    %1 = vector.shape_cast %0 : vector<1x16x256xf32> to vector<16x256xf32>
    %c0_2 = arith.constant 0 : index
    %c0_3 = arith.constant 0 : index
    %2 = vector.load %arg2[%c0_2, %c0_3] : memref<16x1xf32, #tpu.memory_space<vmem>>, vector<16x1xf32>
    %3 = vector.broadcast %2 : vector<16x1xf32> to vector<16x256xf32>
    %4 = arith.mulf %1, %3 : vector<16x256xf32>
    %c0_4 = arith.constant 0 : index
    %c0_5 = arith.constant 0 : index
    %5 = vector.load %arg3[%c0_4, %c0_5] : memref<16x1xf32, #tpu.memory_space<vmem>>, vector<16x1xf32>
    %6 = vector.broadcast %5 : vector<16x1xf32> to vector<16x256xf32>
    %7 = arith.addf %4, %6 : vector<16x256xf32>
    %cst = arith.constant 0.000000e+00 : f32
    %8 = vector.broadcast %cst : f32 to vector<16x256xf32>
    %9 = arith.maximumf %7, %8 : vector<16x256xf32>
    %c0_6 = arith.constant 0 : index
    %c0_7 = arith.constant 0 : index
    %10 = vector.load %arg4[%c0_6, %c0_7] : memref<8x16xf32, #tpu.memory_space<vmem>>, vector<8x16xf32>
    %cst_8 = arith.constant dense<0.000000e+00> : vector<8x256xf32>
    %11 = tpu.matmul %10, %9, %cst_8 {dimension_numbers = #tpu.dot_dimension_numbers<[1], [0], [0], [1], [0, 0, 1, 1], [], []>} : vector<8x16xf32>, vector<16x256xf32>, vector<8x256xf32> -> vector<8x256xf32>
    %c0_9 = arith.constant 0 : index
    %c0_10 = arith.constant 0 : index
    %12 = vector.load %arg5[%c0_9, %c0_10] : memref<8x1xf32, #tpu.memory_space<vmem>>, vector<8x1xf32>
    %13 = vector.broadcast %12 : vector<8x1xf32> to vector<8x256xf32>
    %14 = arith.addf %11, %13 : vector<8x256xf32>
    %cst_11 = arith.constant 0.000000e+00 : f32
    %15 = vector.broadcast %cst_11 : f32 to vector<8x256xf32>
    %16 = arith.maximumf %14, %15 : vector<8x256xf32>
    %cst_12 = arith.constant 0.000000e+00 : f32
    %17 = vector.broadcast %cst_12 : f32 to vector<8x128xf32>
    %c0_13 = arith.constant 0 : index
    %c0_14 = arith.constant 0 : index
    %18 = vector.load %arg11[%c0_13, %c0_14] : memref<8x512xf32, #tpu.memory_space<vmem>>, vector<8x128xf32>
    tpu.vector_store %arg11[%c0_13, %c0_14], %17 {strides = array<i32>} : memref<8x512xf32, #tpu.memory_space<vmem>>, vector<8x128xf32>,
    %cst_15 = arith.constant 0.000000e+00 : f32
    %19 = vector.broadcast %cst_15 : f32 to vector<8x128xf32>
    %c0_16 = arith.constant 0 : index
    %c384 = arith.constant 384 : index
    %20 = vector.load %arg11[%c0_16, %c384] : memref<8x512xf32, #tpu.memory_space<vmem>>, vector<8x128xf32>
    tpu.vector_store %arg11[%c0_16, %c384], %19 {strides = array<i32>} : memref<8x512xf32, #tpu.memory_space<vmem>>, vector<8x128xf32>,
    %c0_17 = arith.constant 0 : index
    %c128 = arith.constant 128 : index
    %21 = vector.load %arg11[%c0_17, %c128] : memref<8x512xf32, #tpu.memory_space<vmem>>, vector<8x256xf32>
    tpu.vector_store %arg11[%c0_17, %c128], %16 {strides = array<i32>} : memref<8x512xf32, #tpu.memory_space<vmem>>, vector<8x256xf32>,
    %c0_18 = arith.constant 0 : index
    %c111 = arith.constant 111 : index
    %22 = vector.load %arg11[%c0_18, %c111] : memref<8x512xf32, #tpu.memory_space<vmem>>, vector<8x256xf32>
    %c0_19 = arith.constant 0 : index
    %c0_20 = arith.constant 0 : index
    %23 = vector.load %arg7[%c0_19, %c0_20] : memref<3x256xf32, #tpu.memory_space<vmem>>, vector<1x256xf32>
    %24 = vector.broadcast %23 : vector<1x256xf32> to vector<8x256xf32>
    %25 = arith.mulf %22, %24 : vector<8x256xf32>
    %c0_21 = arith.constant 0 : index
    %c112 = arith.constant 112 : index
    %26 = vector.load %arg11[%c0_21, %c112] : memref<8x512xf32, #tpu.memory_space<vmem>>, vector<8x256xf32>
    %c0_22 = arith.constant 0 : index
    %c113 = arith.constant 113 : index
    %27 = vector.load %arg11[%c0_22, %c113] : memref<8x512xf32, #tpu.memory_space<vmem>>, vector<8x256xf32>
    %c2 = arith.constant 2 : index
    %c0_23 = arith.constant 0 : index
    %28 = vector.load %arg7[%c2, %c0_23] : memref<3x256xf32, #tpu.memory_space<vmem>>, vector<1x256xf32>
    %29 = vector.broadcast %28 : vector<1x256xf32> to vector<8x256xf32>
    %30 = arith.mulf %27, %29 : vector<8x256xf32>
    %c0_24 = arith.constant 0 : index
    %c127 = arith.constant 127 : index
    %31 = vector.load %arg11[%c0_24, %c127] : memref<8x512xf32, #tpu.memory_space<vmem>>, vector<8x256xf32>
    %c0_25 = arith.constant 0 : index
    %c0_26 = arith.constant 0 : index
    %32 = vector.load %arg7[%c0_25, %c0_26] : memref<3x256xf32, #tpu.memory_space<vmem>>, vector<1x256xf32>
    %33 = vector.broadcast %32 : vector<1x256xf32> to vector<8x256xf32>
    %34 = arith.mulf %31, %33 : vector<8x256xf32>
    %c0_27 = arith.constant 0 : index
    %c128_28 = arith.constant 128 : index
    %35 = vector.load %arg11[%c0_27, %c128_28] : memref<8x512xf32, #tpu.memory_space<vmem>>, vector<8x256xf32>
    %c0_29 = arith.constant 0 : index
    %c129 = arith.constant 129 : index
    %36 = vector.load %arg11[%c0_29, %c129] : memref<8x512xf32, #tpu.memory_space<vmem>>, vector<8x256xf32>
    %c2_30 = arith.constant 2 : index
    %c0_31 = arith.constant 0 : index
    %37 = vector.load %arg7[%c2_30, %c0_31] : memref<3x256xf32, #tpu.memory_space<vmem>>, vector<1x256xf32>
    %38 = vector.broadcast %37 : vector<1x256xf32> to vector<8x256xf32>
    %39 = arith.mulf %36, %38 : vector<8x256xf32>
    %c0_32 = arith.constant 0 : index
    %c143 = arith.constant 143 : index
    %40 = vector.load %arg11[%c0_32, %c143] : memref<8x512xf32, #tpu.memory_space<vmem>>, vector<8x256xf32>
    %c0_33 = arith.constant 0 : index
    %c0_34 = arith.constant 0 : index
    %41 = vector.load %arg7[%c0_33, %c0_34] : memref<3x256xf32, #tpu.memory_space<vmem>>, vector<1x256xf32>
    %42 = vector.broadcast %41 : vector<1x256xf32> to vector<8x256xf32>
    %43 = arith.mulf %40, %42 : vector<8x256xf32>
    %c0_35 = arith.constant 0 : index
    %c144 = arith.constant 144 : index
    %44 = vector.load %arg11[%c0_35, %c144] : memref<8x512xf32, #tpu.memory_space<vmem>>, vector<8x256xf32>
    %c0_36 = arith.constant 0 : index
    %c145 = arith.constant 145 : index
    %45 = vector.load %arg11[%c0_36, %c145] : memref<8x512xf32, #tpu.memory_space<vmem>>, vector<8x256xf32>
    %c2_37 = arith.constant 2 : index
    %c0_38 = arith.constant 0 : index
    %46 = vector.load %arg7[%c2_37, %c0_38] : memref<3x256xf32, #tpu.memory_space<vmem>>, vector<1x256xf32>
    %47 = vector.broadcast %46 : vector<1x256xf32> to vector<8x256xf32>
    %48 = arith.mulf %45, %47 : vector<8x256xf32>
    %49 = tpu.concatenate %25, %26, %30, %34, %35, %39, %43, %44, %48 in 0 : vector<8x256xf32>, vector<8x256xf32>, vector<8x256xf32>, vector<8x256xf32>, vector<8x256xf32>, vector<8x256xf32>, vector<8x256xf32>, vector<8x256xf32>, vector<8x256xf32> -> vector<72x256xf32>
    %c0_39 = arith.constant 0 : index
    %c0_40 = arith.constant 0 : index
    %50 = vector.load %arg6[%c0_39, %c0_40] : memref<8x72xf32, #tpu.memory_space<vmem>>, vector<8x72xf32>
    %cst_41 = arith.constant dense<0.000000e+00> : vector<8x256xf32>
    %51 = tpu.matmul %50, %49, %cst_41 {dimension_numbers = #tpu.dot_dimension_numbers<[1], [0], [0], [1], [0, 0, 1, 1], [], []>} : vector<8x72xf32>, vector<72x256xf32>, vector<8x256xf32> -> vector<8x256xf32>
    %c0_42 = arith.constant 0 : index
    %c0_43 = arith.constant 0 : index
    %52 = vector.load %arg8[%c0_42, %c0_43] : memref<8x1xf32, #tpu.memory_space<vmem>>, vector<8x1xf32>
    %53 = vector.broadcast %52 : vector<8x1xf32> to vector<8x256xf32>
    %54 = arith.addf %51, %53 : vector<8x256xf32>
    %cst_44 = arith.constant 0.000000e+00 : f32
    %55 = vector.broadcast %cst_44 : f32 to vector<8x256xf32>
    %56 = arith.maximumf %54, %55 : vector<8x256xf32>
    %c0_45 = arith.constant 0 : index
    %c0_46 = arith.constant 0 : index
    %57 = vector.load %arg9[%c0_45, %c0_46] : memref<32x8xf32, #tpu.memory_space<vmem>>, vector<32x8xf32>
    %cst_47 = arith.constant dense<0.000000e+00> : vector<32x256xf32>
    %58 = tpu.matmul %57, %56, %cst_47 {dimension_numbers = #tpu.dot_dimension_numbers<[1], [0], [0], [1], [0, 0, 1, 1], [], []>} : vector<32x8xf32>, vector<8x256xf32>, vector<32x256xf32> -> vector<32x256xf32>
    %c0_48 = arith.constant 0 : index
    %c0_49 = arith.constant 0 : index
    %c0_50 = arith.constant 0 : index
    %59 = vector.load %arg10[%c0_48, %c0_49, %c0_50] : memref<1x32x256xf32, #tpu.memory_space<vmem>>, vector<1x32x256xf32>
    %60 = vector.shape_cast %59 : vector<1x32x256xf32> to vector<32x256xf32>
    %61 = vector.shape_cast %58 : vector<32x256xf32> to vector<1x32x256xf32>
    tpu.vector_store %arg10[%c0_48, %c0_49, %c0_50], %61 {strides = array<i32>} : memref<1x32x256xf32, #tpu.memory_space<vmem>>, vector<1x32x256xf32>,
    return
  }
  func.func @transform_0(%arg0: i32) -> (i32, i32, i32) {
    %c0_i32 = arith.constant 0 : i32
    %c0_i32_0 = arith.constant 0 : i32
    %c0_i32_1 = arith.constant 0 : i32
    return %arg0, %c0_i32, %c0_i32_0 : i32, i32, i32
  }
  func.func @transform_1(%arg0: i32) -> (i32, i32) {
    %c0_i32 = arith.constant 0 : i32
    %c0_i32_0 = arith.constant 0 : i32
    %c0_i32_1 = arith.constant 0 : i32
    return %c0_i32, %c0_i32_0 : i32, i32
  }
  func.func @transform_2(%arg0: i32) -> (i32, i32) {
    %c0_i32 = arith.constant 0 : i32
    %c0_i32_0 = arith.constant 0 : i32
    %c0_i32_1 = arith.constant 0 : i32
    return %c0_i32, %c0_i32_0 : i32, i32
  }
  func.func @transform_3(%arg0: i32) -> (i32, i32) {
    %c0_i32 = arith.constant 0 : i32
    %c0_i32_0 = arith.constant 0 : i32
    %c0_i32_1 = arith.constant 0 : i32
    return %c0_i32, %c0_i32_0 : i32, i32
  }
  func.func @transform_4(%arg0: i32) -> (i32, i32) {
    %c0_i32 = arith.constant 0 : i32
    %c0_i32_0 = arith.constant 0 : i32
    %c0_i32_1 = arith.constant 0 : i32
    return %c0_i32, %c0_i32_0 : i32, i32
  }
  func.func @transform_5(%arg0: i32) -> (i32, i32) {
    %c0_i32 = arith.constant 0 : i32
    %c0_i32_0 = arith.constant 0 : i32
    %c0_i32_1 = arith.constant 0 : i32
    return %c0_i32, %c0_i32_0 : i32, i32
  }
  func.func @transform_6(%arg0: i32) -> (i32, i32) {
    %c0_i32 = arith.constant 0 : i32
    %c0_i32_0 = arith.constant 0 : i32
    %c0_i32_1 = arith.constant 0 : i32
    return %c0_i32, %c0_i32_0 : i32, i32
  }
  func.func @transform_7(%arg0: i32) -> (i32, i32) {
    %c0_i32 = arith.constant 0 : i32
    %c0_i32_0 = arith.constant 0 : i32
    %c0_i32_1 = arith.constant 0 : i32
    return %c0_i32, %c0_i32_0 : i32, i32
  }
  func.func @transform_8(%arg0: i32) -> (i32, i32) {
    %c0_i32 = arith.constant 0 : i32
    %c0_i32_0 = arith.constant 0 : i32
    %c0_i32_1 = arith.constant 0 : i32
    return %c0_i32, %c0_i32_0 : i32, i32
  }
  func.func @transform_9(%arg0: i32) -> (i32, i32, i32) {
    %c0_i32 = arith.constant 0 : i32
    %c0_i32_0 = arith.constant 0 : i32
    %c0_i32_1 = arith.constant 0 : i32
    return %arg0, %c0_i32, %c0_i32_0 : i32, i32, i32
  }
}

</mosaic_0001>

<llo_original>
// kernel: tpu_custom_call.1
$region0: #{tpu_custom_call.1}
  #allocation0 [shape = 'u32[]', space=smem, size = 0x4, offset = 0x4, fixed_abs, tag = 'smem constant byte address 0x4 - core index']
  #allocation1 [shape = 'u32[144,128]{1,0:T(1,128)}', space=vmem, size = 0x12000, scoped, tag = 'internal scratch']
  #allocation2 [shape = 'f32[8,512]{1,0:T(8,128)}', space=vmem, size = 0x4000, scoped, tag = 'scratch operand']
  %s0 = inlined_call_operand.vmem [shape: f32[2,16,256], index: 0, kind: input, shape index: {}]
  %s1 = inlined_call_operand.vmem [shape: f32[16,1], index: 1, kind: input, shape index: {}]
  %s2 = inlined_call_operand.vmem [shape: f32[16,1], index: 2, kind: input, shape index: {}]
  %s3 = inlined_call_operand.vmem [shape: f32[8,16], index: 3, kind: input, shape index: {}]
  %s4 = inlined_call_operand.vmem [shape: f32[8,1], index: 4, kind: input, shape index: {}]
  %s5 = inlined_call_operand.vmem [shape: f32[8,72], index: 5, kind: input, shape index: {}]
  %s6 = inlined_call_operand.vmem [shape: f32[3,256], index: 6, kind: input, shape index: {}]
  %s7 = inlined_call_operand.vmem [shape: f32[8,1], index: 7, kind: input, shape index: {}]
  %s8 = inlined_call_operand.vmem [shape: f32[32,8], index: 8, kind: input, shape index: {}]
  %s9 = inlined_call_operand.hbm [shape: f32[2,32,256], index: 9, kind: output, shape index: {}]
  %s10 = sld [smem:[#allocation0]]
  $region69: #{tpu_custom_call.1} parent=0
    _
  %s12 = ssub.s32 1, %s10
  %s13 = scalar_select 0, %s12, %s10
  $region1: #{tpu_custom_call.1} parent=0
    #allocation3 [shape = 'u8[65536]{0}', space=vmem, size = 0x10000, scoped, tag = 'output window, operand 0']
    #allocation4 [shape = 's32[2]{0}', space=sflag, size = 0x8, scoped, tag = 'scoped memory for tpu_custom_call.1']
    %14 = vsyncpa [#allocation4], 0
    %s15 = scalar_lea.sflag [#allocation4], 1
    %16 = vsyncpa %s15, 0
    loop: start=0, step=1, limit=4
    $region2: #{tpu_custom_call.1} parent=1 // loop_pre_header
      _
    $region3: #{tpu_custom_call.1} parent=1 // loop_header
      %s18 = sphi 0, %s22
      %p19 = scmp.ge.s32.totalorder %s18, 4
      %s28 = sphi 0, %s30
      %s31 = sphi 0, %s28
      %s32 = sphi 0, %s31
      %s48 = sphi 0, %s32
      %s52 = sphi 0, %s52
      %s54 = sphi 0, %s52
      %s55 = sphi 0, %s54
      %s69 = sphi 0, %s55
      %s73 = sphi 0, %s73
      %s75 = sphi 0, %s73
      %s76 = sphi 0, %s75
      %s90 = sphi 0, %s76
      %s94 = sphi 0, %s94
      %s96 = sphi 0, %s94
      %s97 = sphi 0, %s96
      %s111 = sphi 0, %s97
      %s115 = sphi 0, %s115
      %s117 = sphi 0, %s115
      %s118 = sphi 0, %s117
      %s132 = sphi 0, %s118
      %s136 = sphi 0, %s136
      %s138 = sphi 0, %s136
      %s139 = sphi 0, %s138
      %s153 = sphi 0, %s139
      %s157 = sphi 0, %s157
      %s159 = sphi 0, %s157
      %s160 = sphi 0, %s159
      %s174 = sphi 0, %s160
      %s178 = sphi 0, %s178
      %s180 = sphi 0, %s178
      %s181 = sphi 0, %s180
      %s195 = sphi 0, %s181
      %s199 = sphi 0, %s199
      %s201 = sphi 0, %s199
      %s202 = sphi 0, %s201
      %s216 = sphi 0, %s202
      %s222 = sphi 0, %s224
      %s225 = sphi 0, %s222
      %s226 = sphi 0, %s225
      %s242 = sphi 0, %s226
    $region4: #{tpu_custom_call.1} parent=1 // loop_header_branch
      %21 = sbr.rel (%p19) target = $region8
    $region5: #{tpu_custom_call.1} parent=1 // loop_body
      %s23 = ssub.s32 %s18, 1
      %s24 = ssub.s32 %s18, 2
      %s25 = sadd.s32 %s18, 1
      %s26 = ssub.s32 %s18, %s25
      %p27 = scmp.eq.s32.totalorder %s26, 0
      %s29 = sadd.s32 %s28, 1
      %s30 = scalar_select %p27, %s28, %s29
      %p33 = pneg %p27
      %p34 = scmp.eq.s32.totalorder %s18, 1
      %p35 = por %p33, %p34
      %p36 = scmp.ne.s32.totalorder %s28, %s31
      %p37 = scmp.eq.s32.totalorder %s18, 0
      %p38 = por %p36, %p37
      %p39 = scmp.ne.s32.totalorder %s28, %s31
      %p40 = scmp.eq.s32.totalorder %s23, 1
      %p41 = por %p39, %p40
      %p42 = scmp.ne.s32.totalorder %s31, %s32
      %p43 = scmp.eq.s32.totalorder %s23, 0
      %p44 = por %p42, %p43
      %p45 = scmp.ne.s32.totalorder %s31, %s32
      %p46 = scmp.eq.s32.totalorder %s24, 1
      %p47 = por %p45, %p46
      %p49 = scmp.ne.s32.totalorder %s32, %s48
      %p50 = scmp.eq.s32.totalorder %s24, 0
      %p51 = por %p49, %p50
      %s53 = sadd.s32 %s52, 1
      %p56 = scmp.eq.s32.totalorder %s18, 1
      %p57 = scmp.ne.s32.totalorder %s52, %s54
      %p58 = scmp.eq.s32.totalorder %s18, 0
      %p59 = por %p57, %p58
      %p60 = scmp.ne.s32.totalorder %s52, %s54
      %p61 = scmp.eq.s32.totalorder %s23, 1
      %p62 = por %p60, %p61
      %p63 = scmp.ne.s32.totalorder %s54, %s55
      %p64 = scmp.eq.s32.totalorder %s23, 0
      %p65 = por %p63, %p64
      %p66 = scmp.ne.s32.totalorder %s54, %s55
      %p67 = scmp.eq.s32.totalorder %s24, 1
      %p68 = por %p66, %p67
      %p70 = scmp.ne.s32.totalorder %s55, %s69
      %p71 = scmp.eq.s32.totalorder %s24, 0
      %p72 = por %p70, %p71
      %s74 = sadd.s32 %s73, 1
      %p77 = scmp.eq.s32.totalorder %s18, 1
      %p78 = scmp.ne.s32.totalorder %s73, %s75
      %p79 = scmp.eq.s32.totalorder %s18, 0
      %p80 = por %p78, %p79
      %p81 = scmp.ne.s32.totalorder %s73, %s75
      %p82 = scmp.eq.s32.totalorder %s23, 1
      %p83 = por %p81, %p82
      %p84 = scmp.ne.s32.totalorder %s75, %s76
      %p85 = scmp.eq.s32.totalorder %s23, 0
      %p86 = por %p84, %p85
      %p87 = scmp.ne.s32.totalorder %s75, %s76
      %p88 = scmp.eq.s32.totalorder %s24, 1
      %p89 = por %p87, %p88
      %p91 = scmp.ne.s32.totalorder %s76, %s90
      %p92 = scmp.eq.s32.totalorder %s24, 0
      %p93 = por %p91, %p92
      %s95 = sadd.s32 %s94, 1
      %p98 = scmp.eq.s32.totalorder %s18, 1
      %p99 = scmp.ne.s32.totalorder %s94, %s96
      %p100 = scmp.eq.s32.totalorder %s18, 0
      %p101 = por %p99, %p100
      %p102 = scmp.ne.s32.totalorder %s94, %s96
      %p103 = scmp.eq.s32.totalorder %s23, 1
      %p104 = por %p102, %p103
      %p105 = scmp.ne.s32.totalorder %s96, %s97
      %p106 = scmp.eq.s32.totalorder %s23, 0
      %p107 = por %p105, %p106
      %p108 = scmp.ne.s32.totalorder %s96, %s97
      %p109 = scmp.eq.s32.totalorder %s24, 1
      %p110 = por %p108, %p109
      %p112 = scmp.ne.s32.totalorder %s97, %s111
      %p113 = scmp.eq.s32.totalorder %s24, 0
      %p114 = por %p112, %p113
      %s116 = sadd.s32 %s115, 1
      %p119 = scmp.eq.s32.totalorder %s18, 1
      %p120 = scmp.ne.s32.totalorder %s115, %s117
      %p121 = scmp.eq.s32.totalorder %s18, 0
      %p122 = por %p120, %p121
      %p123 = scmp.ne.s32.totalorder %s115, %s117
      %p124 = scmp.eq.s32.totalorder %s23, 1
      %p125 = por %p123, %p124
      %p126 = scmp.ne.s32.totalorder %s117, %s118
      %p127 = scmp.eq.s32.totalorder %s23, 0
      %p128 = por %p126, %p127
      %p129 = scmp.ne.s32.totalorder %s117, %s118
      %p130 = scmp.eq.s32.totalorder %s24, 1
      %p131 = por %p129, %p130
      %p133 = scmp.ne.s32.totalorder %s118, %s132
      %p134 = scmp.eq.s32.totalorder %s24, 0
      %p135 = por %p133, %p134
      %s137 = sadd.s32 %s136, 1
      %p140 = scmp.eq.s32.totalorder %s18, 1
      %p141 = scmp.ne.s32.totalorder %s136, %s138
      %p142 = scmp.eq.s32.totalorder %s18, 0
      %p143 = por %p141, %p142
      %p144 = scmp.ne.s32.totalorder %s136, %s138
      %p145 = scmp.eq.s32.totalorder %s23, 1
      %p146 = por %p144, %p145
      %p147 = scmp.ne.s32.totalorder %s138, %s139
      %p148 = scmp.eq.s32.totalorder %s23, 0
      %p149 = por %p147, %p148
      %p150 = scmp.ne.s32.totalorder %s138, %s139
      %p151 = scmp.eq.s32.totalorder %s24, 1
      %p152 = por %p150, %p151
      %p154 = scmp.ne.s32.totalorder %s139, %s153
      %p155 = scmp.eq.s32.totalorder %s24, 0
      %p156 = por %p154, %p155
      %s158 = sadd.s32 %s157, 1
      %p161 = scmp.eq.s32.totalorder %s18, 1
      %p162 = scmp.ne.s32.totalorder %s157, %s159
      %p163 = scmp.eq.s32.totalorder %s18, 0
      %p164 = por %p162, %p163
      %p165 = scmp.ne.s32.totalorder %s157, %s159
      %p166 = scmp.eq.s32.totalorder %s23, 1
      %p167 = por %p165, %p166
      %p168 = scmp.ne.s32.totalorder %s159, %s160
      %p169 = scmp.eq.s32.totalorder %s23, 0
      %p170 = por %p168, %p169
      %p171 = scmp.ne.s32.totalorder %s159, %s160
      %p172 = scmp.eq.s32.totalorder %s24, 1
      %p173 = por %p171, %p172
      %p175 = scmp.ne.s32.totalorder %s160, %s174
      %p176 = scmp.eq.s32.totalorder %s24, 0
      %p177 = por %p175, %p176
      %s179 = sadd.s32 %s178, 1
      %p182 = scmp.eq.s32.totalorder %s18, 1
      %p183 = scmp.ne.s32.totalorder %s178, %s180
      %p184 = scmp.eq.s32.totalorder %s18, 0
      %p185 = por %p183, %p184
      %p186 = scmp.ne.s32.totalorder %s178, %s180
      %p187 = scmp.eq.s32.totalorder %s23, 1
      %p188 = por %p186, %p187
      %p189 = scmp.ne.s32.totalorder %s180, %s181
      %p190 = scmp.eq.s32.totalorder %s23, 0
      %p191 = por %p189, %p190
      %p192 = scmp.ne.s32.totalorder %s180, %s181
      %p193 = scmp.eq.s32.totalorder %s24, 1
      %p194 = por %p192, %p193
      %p196 = scmp.ne.s32.totalorder %s181, %s195
      %p197 = scmp.eq.s32.totalorder %s24, 0
      %p198 = por %p196, %p197
      %s200 = sadd.s32 %s199, 1
      %p203 = scmp.eq.s32.totalorder %s18, 1
      %p204 = scmp.ne.s32.totalorder %s199, %s201
      %p205 = scmp.eq.s32.totalorder %s18, 0
      %p206 = por %p204, %p205
      %p207 = scmp.ne.s32.totalorder %s199, %s201
      %p208 = scmp.eq.s32.totalorder %s23, 1
      %p209 = por %p207, %p208
      %p210 = scmp.ne.s32.totalorder %s201, %s202
      %p211 = scmp.eq.s32.totalorder %s23, 0
      %p212 = por %p210, %p211
      %p213 = scmp.ne.s32.totalorder %s201, %s202
      %p214 = scmp.eq.s32.totalorder %s24, 1
      %p215 = por %p213, %p214
      %p217 = scmp.ne.s32.totalorder %s202, %s216
      %p218 = scmp.eq.s32.totalorder %s24, 0
      %p219 = por %p217, %p218
      %s220 = ssub.s32 %s18, %s25
      %p221 = scmp.eq.s32.totalorder %s220, 0
      %s223 = sadd.s32 %s222, 1
      %s224 = scalar_select %p221, %s222, %s223
      %p227 = pneg %p221
      %p228 = scmp.eq.s32.totalorder %s18, 1
      %p229 = por %p227, %p228
      %p230 = scmp.ne.s32.totalorder %s222, %s225
      %p231 = scmp.eq.s32.totalorder %s18, 0
      %p232 = por %p230, %p231
      %p233 = scmp.ne.s32.totalorder %s222, %s225
      %p234 = scmp.eq.s32.totalorder %s23, 1
      %p235 = por %p233, %p234
      %p236 = scmp.ne.s32.totalorder %s225, %s226
      %p237 = scmp.eq.s32.totalorder %s23, 0
      %p238 = por %p236, %p237
      %p239 = scmp.ne.s32.totalorder %s225, %s226
      %p240 = scmp.eq.s32.totalorder %s24, 1
      %p241 = por %p239, %p240
      %p243 = scmp.ne.s32.totalorder %s226, %s242
      %p244 = scmp.eq.s32.totalorder %s24, 0
      %p245 = por %p243, %p244
      %p246 = scmp.le.s32.totalorder 1, %s18
      %p247 = scmp.lt.s32.totalorder %s18, 3
      %p248 = pnand %p246, %p247
      %p249 = pneg %p248
      // Predicated region
      $region9: #{tpu_custom_call.1} parent=5 // pred_check
        _
      $region10: #{tpu_custom_call.1} parent=5 // pred_check_branch
        %251 = sbr.rel (%p248) target = $region12
      $region11: #{tpu_custom_call.1} parent=5 // pred_region
        %s252 = ssub.s32 %s18, 1
        // Predicated region
        $region13: #{tpu_custom_call.1} parent=11 // pred_check
          %p253 = pneg %p65
        $region14: #{tpu_custom_call.1} parent=11 // pred_check_branch
          %255 = sbr.rel (%p253) target = $region16
        $region15: #{tpu_custom_call.1} parent=11 // pred_region
          _
        $region16: #{tpu_custom_call.1} parent=11 // pred_fallthru
          _
        // Predicated region
        $region17: #{tpu_custom_call.1} parent=11 // pred_check
          %p256 = pneg %p86
        $region18: #{tpu_custom_call.1} parent=11 // pred_check_branch
          %258 = sbr.rel (%p256) target = $region20
        $region19: #{tpu_custom_call.1} parent=11 // pred_region
          _
        $region20: #{tpu_custom_call.1} parent=11 // pred_fallthru
          _
        // Predicated region
        $region21: #{tpu_custom_call.1} parent=11 // pred_check
          %p259 = pneg %p107
        $region22: #{tpu_custom_call.1} parent=11 // pred_check_branch
          %261 = sbr.rel (%p259) target = $region24
        $region23: #{tpu_custom_call.1} parent=11 // pred_region
          _
        $region24: #{tpu_custom_call.1} parent=11 // pred_fallthru
          _
        // Predicated region
        $region25: #{tpu_custom_call.1} parent=11 // pred_check
          %p262 = pneg %p128
        $region26: #{tpu_custom_call.1} parent=11 // pred_check_branch
          %264 = sbr.rel (%p262) target = $region28
        $region27: #{tpu_custom_call.1} parent=11 // pred_region
          _
        $region28: #{tpu_custom_call.1} parent=11 // pred_fallthru
          _
        // Predicated region
        $region29: #{tpu_custom_call.1} parent=11 // pred_check
          %p265 = pneg %p149
        $region30: #{tpu_custom_call.1} parent=11 // pred_check_branch
          %267 = sbr.rel (%p265) target = $region32
        $region31: #{tpu_custom_call.1} parent=11 // pred_region
          _
        $region32: #{tpu_custom_call.1} parent=11 // pred_fallthru
          _
        // Predicated region
        $region33: #{tpu_custom_call.1} parent=11 // pred_check
          %p268 = pneg %p170
        $region34: #{tpu_custom_call.1} parent=11 // pred_check_branch
          %270 = sbr.rel (%p268) target = $region36
        $region35: #{tpu_custom_call.1} parent=11 // pred_region
          _
        $region36: #{tpu_custom_call.1} parent=11 // pred_fallthru
          _
        // Predicated region
        $region37: #{tpu_custom_call.1} parent=11 // pred_check
          %p271 = pneg %p191
        $region38: #{tpu_custom_call.1} parent=11 // pred_check_branch
          %273 = sbr.rel (%p271) target = $region40
        $region39: #{tpu_custom_call.1} parent=11 // pred_region
          _
        $region40: #{tpu_custom_call.1} parent=11 // pred_fallthru
          _
        // Predicated region
        $region41: #{tpu_custom_call.1} parent=11 // pred_check
          %p274 = pneg %p212
        $region42: #{tpu_custom_call.1} parent=11 // pred_check_branch
          %276 = sbr.rel (%p274) target = $region44
        $region43: #{tpu_custom_call.1} parent=11 // pred_region
          _
        $region44: #{tpu_custom_call.1} parent=11 // pred_fallthru
          _
      $region12: #{tpu_custom_call.1} parent=5 // pred_fallthru
        _
      %p277 = scmp.lt.s32.totalorder %s18, 2
      // Predicated region
      $region45: #{tpu_custom_call.1} parent=5 // pred_check
        %p278 = pneg %p277
      $region46: #{tpu_custom_call.1} parent=5 // pred_check_branch
        %280 = sbr.rel (%p278) target = $region48
      $region47: #{tpu_custom_call.1} parent=5 // pred_region
        // Predicated region
        $region49: #{tpu_custom_call.1} parent=47 // pred_check
          %p281 = pneg %p38
        $region50: #{tpu_custom_call.1} parent=47 // pred_check_branch
          %283 = sbr.rel (%p281) target = $region52
        $region51: #{tpu_custom_call.1} parent=47 // pred_region
          %p284 = scmp.lt.s32.totalorder %s18, 1
          %s285 = scalar_select %p284, %s18, 1
          %s286 = smul.addr %s285, 4
          %s287 = smul.addr %s286, 8
          %s288 = scalar_lea.vmem %s0, %s287
        $region52: #{tpu_custom_call.1} parent=47 // pred_fallthru
          _
      $region48: #{tpu_custom_call.1} parent=5 // pred_fallthru
        _
      %p289 = scmp.le.s32.totalorder 1, %s18
      %p290 = scmp.lt.s32.totalorder %s18, 3
      %p291 = pnand %p289, %p290
      %p292 = pneg %p291
      // Predicated region
      $region53: #{tpu_custom_call.1} parent=5 // pred_check
        _
      $region54: #{tpu_custom_call.1} parent=5 // pred_check_branch
        %294 = sbr.rel (%p291) target = $region56
      $region55: #{tpu_custom_call.1} parent=5 // pred_region
        %s295 = ssub.s32 %s18, 1
        %p296 = scmp.lt.s32.totalorder %s23, 1
        %s297 = scalar_select %p296, %s23, 1
        %s298 = smul.addr %s297, 4
        %s299 = smul.addr %s298, 8
        %s300 = scalar_lea.vmem %s0, %s299
        %p301 = pneg %p44
        %p302 = pneg %p41
        %p303 = pneg %p65
        %p304 = pneg %p62
        %p305 = pneg %p86
        %p306 = pneg %p83
        %p307 = pneg %p107
        %p308 = pneg %p104
        %p309 = pneg %p128
        %p310 = pneg %p125
        %p311 = pneg %p149
        %p312 = pneg %p146
        %p313 = pneg %p170
        %p314 = pneg %p167
        %p315 = pneg %p191
        %p316 = pneg %p188
        %p317 = pneg %p212
        %p318 = pneg %p209
        %p319 = pneg %p238
        %p320 = pneg %p235
        %s321 = sand.u32 %s225, 1
        %s322 = scalar_lea.sflag [#allocation4], %s321
        %s323 = sand.u32 %s225, 1
        %s324 = smul.addr %s323, 64
        %s325 = scalar_lea.vmem [#allocation3], %s324
        %p326 = scmp.lt.s32.totalorder %s23, 1
        %s327 = scalar_select %p326, %s23, 1
        %s328 = smul.addr %s327, 4
        %s329 = smul.addr %s328, 8
        %s330 = scalar_lea.vmem %s0, %s329
        %v331 = vld [vmem:[%s330] sm:$0xff]
        %v332 = vld [vmem:[%s330 + $0x8] sm:$0xff]
        %v333 = vld [vmem:[%s330 + $0x10] sm:$0xff]
        %v334 = vld [vmem:[%s330 + $0x18] sm:$0xff]
        %v335 = vld [vmem:[%s1] sm:$0xff]
        %v336 = vld [vmem:[%s1 + $0x8] sm:$0xff]
        %338 = vset.pattern.permute.xlu0 0
        %339 = vperm.xlu0 %338, %v335
        %v340 = vpop.permute.xlu0 %339
        %343 = vset.pattern.permute.xlu0 0
        %344 = vperm.xlu0 %343, %v336
        %v345 = vpop.permute.xlu0 %344
        %v347 = vmul.f32 %v331, %v340
        %v348 = vmul.f32 %v332, %v340
        %v349 = vmul.f32 %v333, %v345
        %v350 = vmul.f32 %v334, %v345
        %v351 = vld [vmem:[%s2] sm:$0xff]
        %v352 = vld [vmem:[%s2 + $0x8] sm:$0xff]
        %354 = vset.pattern.permute.xlu0 0
        %355 = vperm.xlu0 %354, %v351
        %v356 = vpop.permute.xlu0 %355
        %359 = vset.pattern.permute.xlu0 0
        %360 = vperm.xlu0 %359, %v352
        %v361 = vpop.permute.xlu0 %360
        %v363 = vadd.f32 %v347, %v356
        %v364 = vadd.f32 %v348, %v356
        %v365 = vadd.f32 %v349, %v361
        %v366 = vadd.f32 %v350, %v361
        %v367 = vmax.f32 %v363, 0.0
        %v368 = vmax.f32 %v364, 0.0
        %v369 = vmax.f32 %v365, 0.0
        %v370 = vmax.f32 %v366, 0.0
        %v371 = vld [vmem:[%s3] sm:$0xff]
        %v372 = vld [vmem:[%s4] sm:$0xff]
        %374 = vset.pattern.permute.xlu0 0
        %375 = vperm.xlu0 %374, %v372
        %v376 = vpop.permute.xlu0 %375
        %vm378 = vcmask 130048
        %v380 = vsel %vm378, %v371, 0
        %382 = vmatprep.subr.mxu0 %v368
        %383 = vmatpush1.msra.mxu0 %v367
        %384 = vmatprep.subr.mxu0 %v370
        %385 = vmatpush1.msra.mxu0 %v369
        %386 = vmatprep.subr.mxu0 0.0
        %387 = vmatpush1.msra.mxu0 0.0
        %388 = vmatprep.subr.mxu0 0.0
        %389 = vmatpush1.msra.mxu0 0.0
        %390 = vmatprep.subr.mxu0 0.0
        %391 = vmatpush1.msra.mxu0 0.0
        %392 = vmatprep.subr.mxu0 0.0
        %393 = vmatpush1.msra.mxu0 0.0
        %394 = vmatprep.subr.mxu0 0.0
        %395 = vmatpush1.msra.mxu0 0.0
        %396 = vmatprep.subr.mxu0 0.0
        %397 = vmatpush1.msra.mxu0 0.0
        %398 = vmatprep.subr.mxu0 0.0
        %399 = vmatpush1.msra.mxu0 0.0
        %400 = vmatprep.subr.mxu0 0.0
        %401 = vmatpush1.msra.mxu0 0.0
        %402 = vmatprep.subr.mxu0 0.0
        %403 = vmatpush1.msra.mxu0 0.0
        %404 = vmatprep.subr.mxu0 0.0
        %405 = vmatpush1.msra.mxu0 0.0
        %406 = vmatprep.subr.mxu0 0.0
        %407 = vmatpush1.msra.mxu0 0.0
        %408 = vmatprep.subr.mxu0 0.0
        %409 = vmatpush1.msra.mxu0 0.0
        %410 = vmatprep.subr.mxu0 0.0
        %411 = vmatpush1.msra.mxu0 0.0
        %412 = vmatprep.subr.mxu0 0.0
        %413 = vmatpush1.msra.mxu0 0.0
        %414 = vmatprep.subr.mxu0 0.0
        %415 = vmatpush1.msra.mxu0 0.0
        %416 = vmatprep.subr.mxu0 0.0
        %417 = vmatpush1.msra.mxu0 0.0
        %418 = vmatprep.subr.mxu0 0.0
        %419 = vmatpush1.msra.mxu0 0.0
        %420 = vmatprep.subr.mxu0 0.0
        %421 = vmatpush1.msra.mxu0 0.0
        %422 = vmatprep.subr.mxu0 0.0
        %423 = vmatpush1.msra.mxu0 0.0
        %424 = vmatprep.subr.mxu0 0.0
        %425 = vmatpush1.msra.mxu0 0.0
        %426 = vmatprep.subr.mxu0 0.0
        %427 = vmatpush1.msra.mxu0 0.0
        %428 = vmatprep.subr.mxu0 0.0
        %429 = vmatpush1.msra.mxu0 0.0
        %430 = vmatprep.subr.mxu0 0.0
        %431 = vmatpush1.msra.mxu0 0.0
        %432 = vmatprep.subr.mxu0 0.0
        %433 = vmatpush1.msra.mxu0 0.0
        %434 = vmatprep.subr.mxu0 0.0
        %435 = vmatpush1.msra.mxu0 0.0
        %436 = vmatprep.subr.mxu0 0.0
        %437 = vmatpush1.msra.mxu0 0.0
        %438 = vmatprep.subr.mxu0 0.0
        %439 = vmatpush1.msra.mxu0 0.0
        %440 = vmatprep.subr.mxu0 0.0
        %441 = vmatpush1.msra.mxu0 0.0
        %442 = vmatprep.subr.mxu0 0.0
        %443 = vmatpush1.msra.mxu0 0.0
        %444 = vmatprep.subr.mxu0 0.0
        %445 = vmatpush1.msra.mxu0 0.0
        %446 = vmatprep.mubr.f32.mxu0 0.0
        %447 = vmatmul.mubr.f32.gmra.mrb[0].mxu0 %v380
        %v448 = vpop.f32.mrb[0].mxu0
        %v449 = vadd.f32 %v376, %v448
        %v450 = vpop.f32.mrb[0].mxu0
        %v451 = vadd.f32 %v376, %v450
        %452 = vdwg.mxu0
        %v453 = vmax.f32 %v449, 0.0
        %v454 = vmax.f32 %v451, 0.0
        %455 = vst [vmem:[#allocation2] sm:$0xff] 0.0
        %456 = vst [vmem:[#allocation2 + $0x18] sm:$0xff] 0.0
        %457 = vst [vmem:[#allocation2 + $0x8] sm:$0xff] %v453
        %458 = vst [vmem:[#allocation2 + $0x10] sm:$0xff] %v454
        %v459 = vld [vmem:[#allocation2] sm:$0xff]
        %v460 = vld [vmem:[#allocation2 + $0x8] sm:$0xff]
        %v461 = vld [vmem:[#allocation2 + $0x10] sm:$0xff]
        %v462 = vld [vmem:[%s6] ss:$4 sm:$0x3]
        %v464 = vlaneseq
        %v465 = vshrl.u32 %v464, 7
        %v466 = vsub.s32 0, %v465
        %v467 = vrot.slane %v462, %v466
        %v468 = vlaneseq
        %v469 = vshrl.u32 %v468, 7
        %v470 = vsub.s32 1, %v469
        %v471 = vrot.slane %v462, %v470
        %472 = vrot.lane.b32.xlu0 %v467, 111
        %v473 = vpop.permute.xlu0 %472
        %474 = vrot.lane.b32.xlu0 %v471, 111
        %v475 = vpop.permute.xlu0 %474
        %vm476 = vcmask 908288
        %v477 = vsel %vm476, %v473, %v475
        %v481 = vmul.f32 %v459, %v473
        %v482 = vmul.f32 %v460, %v477
        %v483 = vmul.f32 %v461, %v475
        %s484 = scalar_lea.vmem %s6, 2
        %v485 = vld [vmem:[%s484] ss:$4 sm:$0x3]
        %v487 = vlaneseq
        %v488 = vshrl.u32 %v487, 7
        %v489 = vsub.s32 0, %v488
        %v490 = vrot.slane %v485, %v489
        %v491 = vlaneseq
        %v492 = vshrl.u32 %v491, 7
        %v493 = vsub.s32 1, %v492
        %v494 = vrot.slane %v485, %v493
        %495 = vrot.lane.b32.xlu0 %v490, 113
        %v496 = vpop.permute.xlu0 %495
        %497 = vrot.lane.b32.xlu0 %v494, 113
        %v498 = vpop.permute.xlu0 %497
        %vm499 = vcmask 924672
        %v500 = vsel %vm499, %v496, %v498
        %v504 = vmul.f32 %v459, %v496
        %v505 = vmul.f32 %v460, %v500
        %v506 = vmul.f32 %v461, %v498
        %507 = vrot.lane.b32.xlu0 %v467, 127
        %v508 = vpop.permute.xlu0 %507
        %509 = vrot.lane.b32.xlu0 %v471, 127
        %v510 = vpop.permute.xlu0 %509
        %vm511 = vcmask 1039360
        %v512 = vsel %vm511, %v508, %v510
        %v516 = vmul.f32 %v459, %v508
        %v517 = vmul.f32 %v460, %v512
        %v518 = vmul.f32 %v461, %v510
        %v519 = vld [vmem:[#allocation2 + $0x8] sm:$0xff]
        %v520 = vld [vmem:[#allocation2 + $0x10] sm:$0xff]
        %v521 = vld [vmem:[#allocation2 + $0x18] sm:$0xff]
        %522 = vrot.lane.b32.xlu0 %v490, 1
        %v523 = vpop.permute.xlu0 %522
        %524 = vrot.lane.b32.xlu0 %v494, 1
        %v525 = vpop.permute.xlu0 %524
        %vm526 = vcmask 7168
        %v527 = vsel %vm526, %v523, %v525
        %v531 = vmul.f32 %v519, %v523
        %v532 = vmul.f32 %v520, %v527
        %v533 = vmul.f32 %v521, %v525
        %534 = vrot.lane.b32.xlu0 %v467, 15
        %v535 = vpop.permute.xlu0 %534
        %536 = vrot.lane.b32.xlu0 %v471, 15
        %v537 = vpop.permute.xlu0 %536
        %vm538 = vcmask 121856
        %v539 = vsel %vm538, %v535, %v537
        %v543 = vmul.f32 %v519, %v535
        %v544 = vmul.f32 %v520, %v539
        %v545 = vmul.f32 %v521, %v537
        %546 = vrot.lane.b32.xlu0 %v490, 17
        %v547 = vpop.permute.xlu0 %546
        %548 = vrot.lane.b32.xlu0 %v494, 17
        %v549 = vpop.permute.xlu0 %548
        %vm550 = vcmask 138240
        %v551 = vsel %vm550, %v547, %v549
        %v555 = vmul.f32 %v519, %v547
        %v556 = vmul.f32 %v520, %v551
        %v557 = vmul.f32 %v521, %v549
        %561 = vrot.lane.b32.xlu0 %v459, 127
        %v562 = vpop.permute.xlu0 %561
        %563 = vrot.lane.b32.xlu0 %v460, 127
        %v564 = vpop.permute.xlu0 %563
        %565 = vrot.lane.b32.xlu0 %v461, 127
        %v566 = vpop.permute.xlu0 %565
        %v567 = vsel %vm511, %v562, %v564
        %v568 = vsel %vm511, %v564, %v566
        %572 = vrot.lane.b32.xlu0 %v504, 126
        %v573 = vpop.permute.xlu0 %572
        %574 = vrot.lane.b32.xlu0 %v505, 126
        %v575 = vpop.permute.xlu0 %574
        %576 = vrot.lane.b32.xlu0 %v506, 126
        %v577 = vpop.permute.xlu0 %576
        %vm578 = vcmask 1031168
        %v579 = vsel %vm578, %v573, %v575
        %v580 = vsel %vm578, %v575, %v577
        %584 = vrot.lane.b32.xlu0 %v516, 112
        %v585 = vpop.permute.xlu0 %584
        %586 = vrot.lane.b32.xlu0 %v517, 112
        %v587 = vpop.permute.xlu0 %586
        %588 = vrot.lane.b32.xlu0 %v518, 112
        %v589 = vpop.permute.xlu0 %588
        %vm590 = vcmask 916480
        %v591 = vsel %vm590, %v585, %v587
        %v592 = vsel %vm590, %v587, %v589
        %593 = vrot.lane.b32.xlu0 %v460, 111
        %v594 = vpop.permute.xlu0 %593
        %595 = vrot.lane.b32.xlu0 %v461, 111
        %v596 = vpop.permute.xlu0 %595
        %v597 = vsel %vm476, %v594, %v596
        %601 = vrot.lane.b32.xlu0 %v531, 110
        %v602 = vpop.permute.xlu0 %601
        %603 = vrot.lane.b32.xlu0 %v532, 110
        %v604 = vpop.permute.xlu0 %603
        %605 = vrot.lane.b32.xlu0 %v533, 110
        %v606 = vpop.permute.xlu0 %605
        %vm607 = vcmask 900096
        %v608 = vsel %vm607, %v602, %v604
        %v609 = vsel %vm607, %v604, %v606
        %613 = vrot.lane.b32.xlu0 %v543, 96
        %v614 = vpop.permute.xlu0 %613
        %615 = vrot.lane.b32.xlu0 %v544, 96
        %v616 = vpop.permute.xlu0 %615
        %617 = vrot.lane.b32.xlu0 %v545, 96
        %v618 = vpop.permute.xlu0 %617
        %vm619 = vcmask 785408
        %v620 = vsel %vm619, %v614, %v616
        %v621 = vsel %vm619, %v616, %v618
        %625 = vrot.lane.b32.xlu0 %v519, 95
        %v626 = vpop.permute.xlu0 %625
        %627 = vrot.lane.b32.xlu0 %v520, 95
        %v628 = vpop.permute.xlu0 %627
        %629 = vrot.lane.b32.xlu0 %v521, 95
        %v630 = vpop.permute.xlu0 %629
        %vm631 = vcmask 777216
        %v632 = vsel %vm631, %v626, %v628
        %v633 = vsel %vm631, %v628, %v630
        %637 = vrot.lane.b32.xlu0 %v555, 94
        %v638 = vpop.permute.xlu0 %637
        %639 = vrot.lane.b32.xlu0 %v556, 94
        %v640 = vpop.permute.xlu0 %639
        %641 = vrot.lane.b32.xlu0 %v557, 94
        %v642 = vpop.permute.xlu0 %641
        %vm643 = vcmask 769024
        %v644 = vsel %vm643, %v638, %v640
        %v645 = vsel %vm643, %v640, %v642
        %v646 = vld [vmem:[%s5] sm:$0xff]
        %v647 = vld [vmem:[%s7] sm:$0xff]
        %649 = vset.pattern.permute.xlu0 0
        %650 = vperm.xlu0 %649, %v647
        %v651 = vpop.permute.xlu0 %650
        %656 = vrot.lane.b32.xlu0 %v481, 17
        %v657 = vpop.permute.xlu0 %656
        %658 = vrot.lane.b32.xlu0 %v482, 17
        %v659 = vpop.permute.xlu0 %658
        %660 = vrot.lane.b32.xlu0 %v483, 17
        %v661 = vpop.permute.xlu0 %660
        %662 = vrot.lane.b32.xlu0 %v567, 17
        %v663 = vpop.permute.xlu0 %662
        %664 = vrot.lane.b32.xlu0 %v568, 17
        %v665 = vpop.permute.xlu0 %664
        %666 = vrot.lane.b32.xlu0 %v566, 17
        %v667 = vpop.permute.xlu0 %666
        %668 = vrot.lane.b32.xlu0 %v579, 17
        %v669 = vpop.permute.xlu0 %668
        %670 = vrot.lane.b32.xlu0 %v580, 17
        %v671 = vpop.permute.xlu0 %670
        %672 = vrot.lane.b32.xlu0 %v577, 17
        %v673 = vpop.permute.xlu0 %672
        %674 = vrot.lane.b32.xlu0 %v591, 17
        %v675 = vpop.permute.xlu0 %674
        %676 = vrot.lane.b32.xlu0 %v592, 17
        %v677 = vpop.permute.xlu0 %676
        %678 = vrot.lane.b32.xlu0 %v589, 17
        %v679 = vpop.permute.xlu0 %678
        %680 = vrot.lane.b32.xlu0 %v594, 17
        %v681 = vpop.permute.xlu0 %680
        %682 = vrot.lane.b32.xlu0 %v597, 17
        %v683 = vpop.permute.xlu0 %682
        %684 = vrot.lane.b32.xlu0 %v596, 17
        %v685 = vpop.permute.xlu0 %684
        %686 = vrot.lane.b32.xlu0 %v602, 17
        %v687 = vpop.permute.xlu0 %686
        %688 = vrot.lane.b32.xlu0 %v608, 17
        %v689 = vpop.permute.xlu0 %688
        %690 = vrot.lane.b32.xlu0 %v609, 17
        %v691 = vpop.permute.xlu0 %690
        %692 = vrot.lane.b32.xlu0 %v614, 17
        %v693 = vpop.permute.xlu0 %692
        %694 = vrot.lane.b32.xlu0 %v620, 17
        %v695 = vpop.permute.xlu0 %694
        %696 = vrot.lane.b32.xlu0 %v621, 17
        %v697 = vpop.permute.xlu0 %696
        %698 = vrot.lane.b32.xlu0 %v626, 17
        %v699 = vpop.permute.xlu0 %698
        %700 = vrot.lane.b32.xlu0 %v632, 17
        %v701 = vpop.permute.xlu0 %700
        %702 = vrot.lane.b32.xlu0 %v633, 17
        %v703 = vpop.permute.xlu0 %702
        %704 = vrot.lane.b32.xlu0 %v638, 17
        %v705 = vpop.permute.xlu0 %704
        %706 = vrot.lane.b32.xlu0 %v644, 17
        %v707 = vpop.permute.xlu0 %706
        %708 = vrot.lane.b32.xlu0 %v645, 17
        %v709 = vpop.permute.xlu0 %708
        %v710 = vsel %vm550, %v657, %v659
        %v711 = vsel %vm550, %v659, %v661
        %v712 = vsel %vm550, %v663, %v665
        %v713 = vsel %vm550, %v665, %v667
        %v714 = vsel %vm550, %v669, %v671
        %v715 = vsel %vm550, %v671, %v673
        %v716 = vsel %vm550, %v675, %v677
        %v717 = vsel %vm550, %v677, %v679
        %v718 = vsel %vm550, %v681, %v683
        %v719 = vsel %vm550, %v683, %v685
        %v720 = vsel %vm550, %v687, %v689
        %v721 = vsel %vm550, %v689, %v691
        %v722 = vsel %vm550, %v693, %v695
        %v723 = vsel %vm550, %v695, %v697
        %v724 = vsel %vm550, %v699, %v701
        %v725 = vsel %vm550, %v701, %v703
        %v726 = vsel %vm550, %v705, %v707
        %v727 = vsel %vm550, %v707, %v709
        %vm746 = vcmask 588800
        %v748 = vsel %vm746, %v646, 0
        %750 = vmatprep.subr.mxu0 %v711
        %751 = vmatpush1.msra.mxu0 %v710
        %752 = vmatprep.subr.mxu0 %v713
        %753 = vmatpush1.msra.mxu0 %v712
        %754 = vmatprep.subr.mxu0 %v715
        %755 = vmatpush1.msra.mxu0 %v714
        %756 = vmatprep.subr.mxu0 %v717
        %757 = vmatpush1.msra.mxu0 %v716
        %758 = vmatprep.subr.mxu0 %v719
        %759 = vmatpush1.msra.mxu0 %v718
        %760 = vmatprep.subr.mxu0 %v721
        %761 = vmatpush1.msra.mxu0 %v720
        %762 = vmatprep.subr.mxu0 %v723
        %763 = vmatpush1.msra.mxu0 %v722
        %764 = vmatprep.subr.mxu0 %v725
        %765 = vmatpush1.msra.mxu0 %v724
        %766 = vmatprep.subr.mxu0 %v727
        %767 = vmatpush1.msra.mxu0 %v726
        %768 = vmatprep.subr.mxu0 0.0
        %769 = vmatpush1.msra.mxu0 0.0
        %770 = vmatprep.subr.mxu0 0.0
        %771 = vmatpush1.msra.mxu0 0.0
        %772 = vmatprep.subr.mxu0 0.0
        %773 = vmatpush1.msra.mxu0 0.0
        %774 = vmatprep.subr.mxu0 0.0
        %775 = vmatpush1.msra.mxu0 0.0
        %776 = vmatprep.subr.mxu0 0.0
        %777 = vmatpush1.msra.mxu0 0.0
        %778 = vmatprep.subr.mxu0 0.0
        %779 = vmatpush1.msra.mxu0 0.0
        %780 = vmatprep.subr.mxu0 0.0
        %781 = vmatpush1.msra.mxu0 0.0
        %782 = vmatprep.subr.mxu0 0.0
        %783 = vmatpush1.msra.mxu0 0.0
        %784 = vmatprep.subr.mxu0 0.0
        %785 = vmatpush1.msra.mxu0 0.0
        %786 = vmatprep.subr.mxu0 0.0
        %787 = vmatpush1.msra.mxu0 0.0
        %788 = vmatprep.subr.mxu0 0.0
        %789 = vmatpush1.msra.mxu0 0.0
        %790 = vmatprep.subr.mxu0 0.0
        %791 = vmatpush1.msra.mxu0 0.0
        %792 = vmatprep.subr.mxu0 0.0
        %793 = vmatpush1.msra.mxu0 0.0
        %794 = vmatprep.subr.mxu0 0.0
        %795 = vmatpush1.msra.mxu0 0.0
        %796 = vmatprep.subr.mxu0 0.0
        %797 = vmatpush1.msra.mxu0 0.0
        %798 = vmatprep.subr.mxu0 0.0
        %799 = vmatpush1.msra.mxu0 0.0
        %800 = vmatprep.subr.mxu0 0.0
        %801 = vmatpush1.msra.mxu0 0.0
        %802 = vmatprep.subr.mxu0 0.0
        %803 = vmatpush1.msra.mxu0 0.0
        %804 = vmatprep.subr.mxu0 0.0
        %805 = vmatpush1.msra.mxu0 0.0
        %806 = vmatprep.subr.mxu0 0.0
        %807 = vmatpush1.msra.mxu0 0.0
        %808 = vmatprep.subr.mxu0 0.0
        %809 = vmatpush1.msra.mxu0 0.0
        %810 = vmatprep.subr.mxu0 0.0
        %811 = vmatpush1.msra.mxu0 0.0
        %812 = vmatprep.subr.mxu0 0.0
        %813 = vmatpush1.msra.mxu0 0.0
        %814 = vmatprep.mubr.f32.mxu0 0.0
        %815 = vmatmul.mubr.f32.gmra.mrb[0].mxu0 %v748
        %v816 = vpop.f32.mrb[0].mxu0
        %v817 = vadd.f32 %v651, %v816
        %v818 = vpop.f32.mrb[0].mxu0
        %v819 = vadd.f32 %v651, %v818
        %820 = vdwg.mxu0
        %v821 = vmax.f32 %v817, 0.0
        %v822 = vmax.f32 %v819, 0.0
        %v823 = vld [vmem:[%s8] sm:$0xff]
        %v824 = vld [vmem:[%s8 + $0x8] sm:$0xff]
        %v825 = vld [vmem:[%s8 + $0x10] sm:$0xff]
        %v826 = vld [vmem:[%s8 + $0x18] sm:$0xff]
        %vm827 = vcmask 64512
        %v829 = vsel %vm827, %v823, 0
        %v832 = vsel %vm827, %v824, 0
        %v835 = vsel %vm827, %v825, 0
        %v838 = vsel %vm827, %v826, 0
        %840 = vmatprep.subr.mxu0 %v822
        %841 = vmatpush1.msra.mxu0 %v821
        %842 = vmatprep.subr.mxu0 0.0
        %843 = vmatpush1.msra.mxu0 0.0
        %844 = vmatprep.subr.mxu0 0.0
        %845 = vmatpush1.msra.mxu0 0.0
        %846 = vmatprep.subr.mxu0 0.0
        %847 = vmatpush1.msra.mxu0 0.0
        %848 = vmatprep.subr.mxu0 0.0
        %849 = vmatpush1.msra.mxu0 0.0
        %850 = vmatprep.subr.mxu0 0.0
        %851 = vmatpush1.msra.mxu0 0.0
        %852 = vmatprep.subr.mxu0 0.0
        %853 = vmatpush1.msra.mxu0 0.0
        %854 = vmatprep.subr.mxu0 0.0
        %855 = vmatpush1.msra.mxu0 0.0
        %856 = vmatprep.subr.mxu0 0.0
        %857 = vmatpush1.msra.mxu0 0.0
        %858 = vmatprep.subr.mxu0 0.0
        %859 = vmatpush1.msra.mxu0 0.0
        %860 = vmatprep.subr.mxu0 0.0
        %861 = vmatpush1.msra.mxu0 0.0
        %862 = vmatprep.subr.mxu0 0.0
        %863 = vmatpush1.msra.mxu0 0.0
        %864 = vmatprep.subr.mxu0 0.0
        %865 = vmatpush1.msra.mxu0 0.0
        %866 = vmatprep.subr.mxu0 0.0
        %867 = vmatpush1.msra.mxu0 0.0
        %868 = vmatprep.subr.mxu0 0.0
        %869 = vmatpush1.msra.mxu0 0.0
        %870 = vmatprep.subr.mxu0 0.0
        %871 = vmatpush1.msra.mxu0 0.0
        %872 = vmatprep.subr.mxu0 0.0
        %873 = vmatpush1.msra.mxu0 0.0
        %874 = vmatprep.subr.mxu0 0.0
        %875 = vmatpush1.msra.mxu0 0.0
        %876 = vmatprep.subr.mxu0 0.0
        %877 = vmatpush1.msra.mxu0 0.0
        %878 = vmatprep.subr.mxu0 0.0
        %879 = vmatpush1.msra.mxu0 0.0
        %880 = vmatprep.subr.mxu0 0.0
        %881 = vmatpush1.msra.mxu0 0.0
        %882 = vmatprep.subr.mxu0 0.0
        %883 = vmatpush1.msra.mxu0 0.0
        %884 = vmatprep.subr.mxu0 0.0
        %885 = vmatpush1.msra.mxu0 0.0
        %886 = vmatprep.subr.mxu0 0.0
        %887 = vmatpush1.msra.mxu0 0.0
        %888 = vmatprep.subr.mxu0 0.0
        %889 = vmatpush1.msra.mxu0 0.0
        %890 = vmatprep.subr.mxu0 0.0
        %891 = vmatpush1.msra.mxu0 0.0
        %892 = vmatprep.subr.mxu0 0.0
        %893 = vmatpush1.msra.mxu0 0.0
        %894 = vmatprep.subr.mxu0 0.0
        %895 = vmatpush1.msra.mxu0 0.0
        %896 = vmatprep.subr.mxu0 0.0
        %897 = vmatpush1.msra.mxu0 0.0
        %898 = vmatprep.subr.mxu0 0.0
        %899 = vmatpush1.msra.mxu0 0.0
        %900 = vmatprep.subr.mxu0 0.0
        %901 = vmatpush1.msra.mxu0 0.0
        %902 = vmatprep.subr.mxu0 0.0
        %903 = vmatpush1.msra.mxu0 0.0
        %904 = vmatprep.mubr.f32.mxu0 0.0
        %905 = vmatmul.mubr.f32.gmra.mrb[0].mxu0 %v829
        %v906 = vpop.f32.mrb[0].mxu0
        %v907 = vadd.f32 0.0, %v906
        %v908 = vpop.f32.mrb[0].mxu0
        %v909 = vadd.f32 0.0, %v908
        %910 = vmatprep.mubr.f32.mxu0 0.0
        %911 = vmatmul.mubr.f32.gmra.mrb[0].mxu0 %v832
        %v912 = vpop.f32.mrb[0].mxu0
        %v913 = vadd.f32 0.0, %v912
        %v914 = vpop.f32.mrb[0].mxu0
        %v915 = vadd.f32 0.0, %v914
        %916 = vmatprep.mubr.f32.mxu0 0.0
        %917 = vmatmul.mubr.f32.gmra.mrb[0].mxu0 %v835
        %v918 = vpop.f32.mrb[0].mxu0
        %v919 = vadd.f32 0.0, %v918
        %v920 = vpop.f32.mrb[0].mxu0
        %v921 = vadd.f32 0.0, %v920
        %922 = vmatprep.mubr.f32.mxu0 0.0
        %923 = vmatmul.mubr.f32.gmra.mrb[0].mxu0 %v838
        %v924 = vpop.f32.mrb[0].mxu0
        %v925 = vadd.f32 0.0, %v924
        %v926 = vpop.f32.mrb[0].mxu0
        %v927 = vadd.f32 0.0, %v926
        %928 = vdwg.mxu0
        %929 = vst [vmem:[%s325] sm:$0xff] %v907
        %930 = vst [vmem:[%s325 + $0x8] sm:$0xff] %v909
        %931 = vst [vmem:[%s325 + $0x10] sm:$0xff] %v913
        %932 = vst [vmem:[%s325 + $0x18] sm:$0xff] %v915
        %933 = vst [vmem:[%s325 + $0x20] sm:$0xff] %v919
        %934 = vst [vmem:[%s325 + $0x28] sm:$0xff] %v921
        %935 = vst [vmem:[%s325 + $0x30] sm:$0xff] %v925
        %936 = vst [vmem:[%s325 + $0x38] sm:$0xff] %v927
        %s937 = sand.u32 %s225, 1
        %s938 = scalar_lea.sflag [#allocation4], %s937
        %s939 = sand.u32 %s225, 1
        %s940 = smul.addr %s939, 64
        %s941 = scalar_lea.vmem [#allocation3], %s940
        // Predicated region
        $region57: #{tpu_custom_call.1} parent=55 // pred_check
          %p942 = pneg %p235
        $region58: #{tpu_custom_call.1} parent=55 // pred_check_branch
          %944 = sbr.rel (%p942) target = $region60
        $region59: #{tpu_custom_call.1} parent=55 // pred_region
          %s946 = ssub.s32 1024, 1024
          %947 = vsyncadd %s938, %s946
          %s948 = smul.addr %s23, 8
          %s949 = smul.addr %s948, 128
          %s950 = scalar_lea.hbm %s9, %s949
          %s951 = sshll.u32 %s941, 4
          %s952 = int_to_ptr.vmem [resolvable:$true] %s951
          %957 = dma.vmem_to_hbm [thread:$0]  %s952, 1024, %s950, %s938, 256, 256, 16
        $region60: #{tpu_custom_call.1} parent=55 // pred_fallthru
          _
      $region56: #{tpu_custom_call.1} parent=5 // pred_fallthru
        _
      %p958 = scmp.le.s32.totalorder 2, %s18
      // Predicated region
      $region61: #{tpu_custom_call.1} parent=5 // pred_check
        %p959 = pneg %p958
      $region62: #{tpu_custom_call.1} parent=5 // pred_check_branch
        %961 = sbr.rel (%p959) target = $region64
      $region63: #{tpu_custom_call.1} parent=5 // pred_region
        %s962 = ssub.s32 %s18, 2
        // Predicated region
        $region65: #{tpu_custom_call.1} parent=63 // pred_check
          %p963 = pneg %p241
        $region66: #{tpu_custom_call.1} parent=63 // pred_check_branch
          %965 = sbr.rel (%p963) target = $region68
        $region67: #{tpu_custom_call.1} parent=63 // pred_region
          %s966 = sand.u32 %s226, 1
          %s967 = scalar_lea.sflag [#allocation4], %s966
          %s968 = sand.u32 %s226, 1
          %s969 = smul.addr %s968, 64
          %s970 = scalar_lea.vmem [#allocation3], %s969
          %971 = dma.done %s967, 1024
        $region68: #{tpu_custom_call.1} parent=63 // pred_fallthru
          _
      $region64: #{tpu_custom_call.1} parent=5 // pred_fallthru
        _
    $region6: #{tpu_custom_call.1} parent=1 // loop_footer
      %s22 = sadd.s32 1, %s18
    $region7: #{tpu_custom_call.1} parent=1 // loop_footer_branch
      %17 = sbr.rel target = $region3
    $region8: #{tpu_custom_call.1} parent=1 // loop_exit
      _
    %972 = vsyncpa [#allocation4], 1
    %s973 = scalar_lea.sflag [#allocation4], 1
    %974 = vsyncpa %s973, 1

</llo_original>
